<compile_context>
chip_gen: v5e
topology: v5e:2x2
jax: 0.10.0
libtpu: 0.0.40
codegen_flags: <defaults>
</compile_context>

<pallas_src>
import jax
import jax.numpy as jnp
import numpy as np
from jax.experimental import pallas as pl
from jax.experimental.pallas import tpu as pltpu

D_IN = 3
K = 3
STRIDE = 2
PAD = 1
D_OUT = (D_IN - 1) * STRIDE - 2 * PAD + K       # 5
N_IN = D_IN ** 3                                # 27 input elements
N_TAP = K ** 3                                  # 27 kernel taps
N_OUT = D_OUT ** 3                              # 125 output elements

SUB = 32      # sublane-padded input dimension (27 -> 32)
LANES = 128   # lane-dense output dimension (125 -> 128)


def _build_tap_map():
    """Compile-time tap-index map.

    TAP[j, l] = flat kernel tap k (0..26) such that output l receives
    x[j] * w[k] under ConvTranspose3d(stride=2, pad=1):  o = i*S - P + k.
    -1 where input j does not feed output l, and for all padding rows/lanes
    (j >= 27, l >= 125), so padded positions contribute exactly zero.
    """
    tap = np.full((SUB, LANES), -1, dtype=np.int32)
    for j in range(N_IN):
        j0, j1, j2 = j // 9, (j // 3) % 3, j % 3
        for l in range(N_OUT):
            o0, o1, o2 = l // 25, (l // 5) % 5, l % 5
            k0 = o0 - STRIDE * j0 + PAD
            k1 = o1 - STRIDE * j1 + PAD
            k2 = o2 - STRIDE * j2 + PAD
            if 0 <= k0 < K and 0 <= k1 < K and 0 <= k2 < K:
                tap[j, l] = (k0 * K + k1) * K + k2
    return tap


TAP_MAP = _build_tap_map()


def convt_fused_kernel(w_ref, tap_ref, x_ref, o_ref):
    """w_ref: (27,) SMEM raw ConvTranspose3d weights;
    tap_ref: (32,128) int32 VMEM compile-time tap-index map;
    x_ref:   (32,1) f32 VMEM sublane-padded input column;
    o_ref:   (1,128) f32 VMEM lane-dense output row (first 125 lanes valid)."""
    tap = tap_ref[...]          # (32, 128) int32
    xc = x_ref[...]             # (32, 1)   f32

    # Weight-placement matrix M[j, l] = w[TAP[j, l]] (0 where TAP == -1).
    # Taps are disjoint per (j, l), so the four partials never overlap and
    # can be combined with adds; 4 independent chains expose VALU ILP.
    zeros = jnp.zeros((SUB, LANES), jnp.float32)
    parts = [zeros, zeros, zeros, zeros]
    for k in range(N_TAP):
        i = k % 4
        parts[i] = jnp.where(tap == k, w_ref[k], parts[i])
    m = (parts[0] + parts[1]) + (parts[2] + parts[3])

    # Contraction over the 27 inputs: exact f32 multiply + sublane reduce
    # (XLU slot, otherwise idle).  MXU deliberately not used at this size.
    y = jnp.sum(m * xc, axis=0, keepdims=True)              # (1, 128)

    # Fused elementwise epilogue: where(y > 3, y, y * 6).  Lane-dense store.
    o_ref[...] = jnp.where(y > 3.0, y, y * 6.0)


@jax.jit
def model_forward(x, w):
    """x: (1,1,3,3,3) NCDHW input; w: (1,1,3,3,3) ConvTranspose3d weight
    (in_channels, out_channels, kD, kH, kW)."""
    x_flat = x.reshape(N_IN).astype(jnp.float32)
    x_col = jnp.pad(x_flat, (0, SUB - N_IN)).reshape(SUB, 1)   # layout plumbing
    w_flat = w.reshape(N_TAP).astype(jnp.float32)              # free reshape, no flip
    tap = jnp.asarray(TAP_MAP)                                 # baked constant

    slab = pl.pallas_call(
        convt_fused_kernel,
        out_shape=jax.ShapeDtypeStruct((1, LANES), jnp.float32),
        in_specs=[
            pl.BlockSpec(memory_space=pltpu.MemorySpace.SMEM),   # w scalars
            pl.BlockSpec(memory_space=pltpu.MemorySpace.VMEM),   # tap map
            pl.BlockSpec(memory_space=pltpu.MemorySpace.VMEM),   # x column
        ],
        out_specs=pl.BlockSpec(memory_space=pltpu.MemorySpace.VMEM),
    )(w_flat, tap, x_col)

    # Cheap wrapper-side unpack of the lane-dense row.
    return slab[0, :N_OUT].reshape(1, 1, D_OUT, D_OUT, D_OUT)


def reference_forward(x, w):
    """Direct-formula numpy reference of ConvTranspose3d + where, for validation."""
    xv = np.asarray(x, dtype=np.float32)[0, 0]
    wv = np.asarray(w, dtype=np.float32)[0, 0]
    y = np.zeros((D_OUT, D_OUT, D_OUT), np.float32)
    for i0 in range(D_IN):
        for i1 in range(D_IN):
            for i2 in range(D_IN):
                for k0 in range(K):
                    for k1 in range(K):
                        for k2 in range(K):
                            o0 = i0 * STRIDE - PAD + k0
                            o1 = i1 * STRIDE - PAD + k1
                            o2 = i2 * STRIDE - PAD + k2
                            if (0 <= o0 < D_OUT and 0 <= o1 < D_OUT
                                    and 0 <= o2 < D_OUT):
                                y[o0, o1, o2] += xv[i0, i1, i2] * wv[k0, k1, k2]
    out = np.where(y > 3.0, y, y * 6.0)
    return out.reshape(1, 1, D_OUT, D_OUT, D_OUT)


if __name__ == "__main__":
    key = jax.random.PRNGKey(0)
    kx, kw = jax.random.split(key)

    # Deterministic inputs / parameters (shapes from the module's __init__).
    x0 = jax.random.normal(kx, (1, 1, 3, 3, 3), dtype=jnp.float32)
    # ConvTranspose3d weight shape: (in_channels, out_channels, kD, kH, kW)
    fan_in = 1 * K * K * K
    bound = 1.0 / np.sqrt(fan_in)
    weight = jax.random.uniform(kw, (1, 1, 3, 3, 3), dtype=jnp.float32,
                                minval=-bound, maxval=bound)

    out = model_forward(x0, weight)
    out = jax.block_until_ready(out)

    ref = reference_forward(x0, weight)
    assert out.shape == (1, 1, 5, 5, 5), out.shape
    np.testing.assert_allclose(np.asarray(out), ref, rtol=1e-5, atol=1e-5)

    print("KERNEL_OK")
</pallas_src>

<mosaic_0001>
module attributes {stable_mosaic.version = 11 : i64} {
  func.func @convt_fused_kernel(%arg0: memref<27xf32, #tpu.memory_space<smem>>, %arg1: memref<32x128xi32, #tpu.memory_space<vmem>>, %arg2: memref<32x1xf32, #tpu.memory_space<vmem>>, %arg3: memref<1x128xf32, #tpu.memory_space<vmem>>) attributes {dimension_semantics = [], scalar_prefetch = 0 : i64, scratch_operands = 0 : i64, tpu.core_type = #tpu.core_type<tc>} {
    %c0 = arith.constant 0 : index
    %c0_0 = arith.constant 0 : index
    %0 = vector.load %arg1[%c0, %c0_0] : memref<32x128xi32, #tpu.memory_space<vmem>>, vector<32x128xi32>
    %c0_1 = arith.constant 0 : index
    %c0_2 = arith.constant 0 : index
    %1 = vector.load %arg2[%c0_1, %c0_2] : memref<32x1xf32, #tpu.memory_space<vmem>>, vector<32x1xf32>
    %cst = arith.constant 0.000000e+00 : f32
    %2 = vector.broadcast %cst : f32 to vector<32x128xf32>
    %c0_i32 = arith.constant 0 : i32
    %3 = vector.broadcast %c0_i32 : i32 to vector<32x128xi32>
    %4 = arith.cmpi eq, %0, %3 : vector<32x128xi32>
    %c0_3 = arith.constant 0 : index
    %5 = memref.load %arg0[%c0_3] : memref<27xf32, #tpu.memory_space<smem>>
    %6 = vector.broadcast %5 : f32 to vector<32x128xf32>
    %7 = arith.select %4, %6, %2 : vector<32x128xi1>, vector<32x128xf32>
    %c1_i32 = arith.constant 1 : i32
    %8 = vector.broadcast %c1_i32 : i32 to vector<32x128xi32>
    %9 = arith.cmpi eq, %0, %8 : vector<32x128xi32>
    %c1 = arith.constant 1 : index
    %10 = memref.load %arg0[%c1] : memref<27xf32, #tpu.memory_space<smem>>
    %11 = vector.broadcast %10 : f32 to vector<32x128xf32>
    %12 = arith.select %9, %11, %2 : vector<32x128xi1>, vector<32x128xf32>
    %c2_i32 = arith.constant 2 : i32
    %13 = vector.broadcast %c2_i32 : i32 to vector<32x128xi32>
    %14 = arith.cmpi eq, %0, %13 : vector<32x128xi32>
    %c2 = arith.constant 2 : index
    %15 = memref.load %arg0[%c2] : memref<27xf32, #tpu.memory_space<smem>>
    %16 = vector.broadcast %15 : f32 to vector<32x128xf32>
    %17 = arith.select %14, %16, %2 : vector<32x128xi1>, vector<32x128xf32>
    %c3_i32 = arith.constant 3 : i32
    %18 = vector.broadcast %c3_i32 : i32 to vector<32x128xi32>
    %19 = arith.cmpi eq, %0, %18 : vector<32x128xi32>
    %c3 = arith.constant 3 : index
    %20 = memref.load %arg0[%c3] : memref<27xf32, #tpu.memory_space<smem>>
    %21 = vector.broadcast %20 : f32 to vector<32x128xf32>
    %22 = arith.select %19, %21, %2 : vector<32x128xi1>, vector<32x128xf32>
    %c4_i32 = arith.constant 4 : i32
    %23 = vector.broadcast %c4_i32 : i32 to vector<32x128xi32>
    %24 = arith.cmpi eq, %0, %23 : vector<32x128xi32>
    %c4 = arith.constant 4 : index
    %25 = memref.load %arg0[%c4] : memref<27xf32, #tpu.memory_space<smem>>
    %26 = vector.broadcast %25 : f32 to vector<32x128xf32>
    %27 = arith.select %24, %26, %7 : vector<32x128xi1>, vector<32x128xf32>
    %c5_i32 = arith.constant 5 : i32
    %28 = vector.broadcast %c5_i32 : i32 to vector<32x128xi32>
    %29 = arith.cmpi eq, %0, %28 : vector<32x128xi32>
    %c5 = arith.constant 5 : index
    %30 = memref.load %arg0[%c5] : memref<27xf32, #tpu.memory_space<smem>>
    %31 = vector.broadcast %30 : f32 to vector<32x128xf32>
    %32 = arith.select %29, %31, %12 : vector<32x128xi1>, vector<32x128xf32>
    %c6_i32 = arith.constant 6 : i32
    %33 = vector.broadcast %c6_i32 : i32 to vector<32x128xi32>
    %34 = arith.cmpi eq, %0, %33 : vector<32x128xi32>
    %c6 = arith.constant 6 : index
    %35 = memref.load %arg0[%c6] : memref<27xf32, #tpu.memory_space<smem>>
    %36 = vector.broadcast %35 : f32 to vector<32x128xf32>
    %37 = arith.select %34, %36, %17 : vector<32x128xi1>, vector<32x128xf32>
    %c7_i32 = arith.constant 7 : i32
    %38 = vector.broadcast %c7_i32 : i32 to vector<32x128xi32>
    %39 = arith.cmpi eq, %0, %38 : vector<32x128xi32>
    %c7 = arith.constant 7 : index
    %40 = memref.load %arg0[%c7] : memref<27xf32, #tpu.memory_space<smem>>
    %41 = vector.broadcast %40 : f32 to vector<32x128xf32>
    %42 = arith.select %39, %41, %22 : vector<32x128xi1>, vector<32x128xf32>
    %c8_i32 = arith.constant 8 : i32
    %43 = vector.broadcast %c8_i32 : i32 to vector<32x128xi32>
    %44 = arith.cmpi eq, %0, %43 : vector<32x128xi32>
    %c8 = arith.constant 8 : index
    %45 = memref.load %arg0[%c8] : memref<27xf32, #tpu.memory_space<smem>>
    %46 = vector.broadcast %45 : f32 to vector<32x128xf32>
    %47 = arith.select %44, %46, %27 : vector<32x128xi1>, vector<32x128xf32>
    %c9_i32 = arith.constant 9 : i32
    %48 = vector.broadcast %c9_i32 : i32 to vector<32x128xi32>
    %49 = arith.cmpi eq, %0, %48 : vector<32x128xi32>
    %c9 = arith.constant 9 : index
    %50 = memref.load %arg0[%c9] : memref<27xf32, #tpu.memory_space<smem>>
    %51 = vector.broadcast %50 : f32 to vector<32x128xf32>
    %52 = arith.select %49, %51, %32 : vector<32x128xi1>, vector<32x128xf32>
    %c10_i32 = arith.constant 10 : i32
    %53 = vector.broadcast %c10_i32 : i32 to vector<32x128xi32>
    %54 = arith.cmpi eq, %0, %53 : vector<32x128xi32>
    %c10 = arith.constant 10 : index
    %55 = memref.load %arg0[%c10] : memref<27xf32, #tpu.memory_space<smem>>
    %56 = vector.broadcast %55 : f32 to vector<32x128xf32>
    %57 = arith.select %54, %56, %37 : vector<32x128xi1>, vector<32x128xf32>
    %c11_i32 = arith.constant 11 : i32
    %58 = vector.broadcast %c11_i32 : i32 to vector<32x128xi32>
    %59 = arith.cmpi eq, %0, %58 : vector<32x128xi32>
    %c11 = arith.constant 11 : index
    %60 = memref.load %arg0[%c11] : memref<27xf32, #tpu.memory_space<smem>>
    %61 = vector.broadcast %60 : f32 to vector<32x128xf32>
    %62 = arith.select %59, %61, %42 : vector<32x128xi1>, vector<32x128xf32>
    %c12_i32 = arith.constant 12 : i32
    %63 = vector.broadcast %c12_i32 : i32 to vector<32x128xi32>
    %64 = arith.cmpi eq, %0, %63 : vector<32x128xi32>
    %c12 = arith.constant 12 : index
    %65 = memref.load %arg0[%c12] : memref<27xf32, #tpu.memory_space<smem>>
    %66 = vector.broadcast %65 : f32 to vector<32x128xf32>
    %67 = arith.select %64, %66, %47 : vector<32x128xi1>, vector<32x128xf32>
    %c13_i32 = arith.constant 13 : i32
    %68 = vector.broadcast %c13_i32 : i32 to vector<32x128xi32>
    %69 = arith.cmpi eq, %0, %68 : vector<32x128xi32>
    %c13 = arith.constant 13 : index
    %70 = memref.load %arg0[%c13] : memref<27xf32, #tpu.memory_space<smem>>
    %71 = vector.broadcast %70 : f32 to vector<32x128xf32>
    %72 = arith.select %69, %71, %52 : vector<32x128xi1>, vector<32x128xf32>
    %c14_i32 = arith.constant 14 : i32
    %73 = vector.broadcast %c14_i32 : i32 to vector<32x128xi32>
    %74 = arith.cmpi eq, %0, %73 : vector<32x128xi32>
    %c14 = arith.constant 14 : index
    %75 = memref.load %arg0[%c14] : memref<27xf32, #tpu.memory_space<smem>>
    %76 = vector.broadcast %75 : f32 to vector<32x128xf32>
    %77 = arith.select %74, %76, %57 : vector<32x128xi1>, vector<32x128xf32>
    %c15_i32 = arith.constant 15 : i32
    %78 = vector.broadcast %c15_i32 : i32 to vector<32x128xi32>
    %79 = arith.cmpi eq, %0, %78 : vector<32x128xi32>
    %c15 = arith.constant 15 : index
    %80 = memref.load %arg0[%c15] : memref<27xf32, #tpu.memory_space<smem>>
    %81 = vector.broadcast %80 : f32 to vector<32x128xf32>
    %82 = arith.select %79, %81, %62 : vector<32x128xi1>, vector<32x128xf32>
    %c16_i32 = arith.constant 16 : i32
    %83 = vector.broadcast %c16_i32 : i32 to vector<32x128xi32>
    %84 = arith.cmpi eq, %0, %83 : vector<32x128xi32>
    %c16 = arith.constant 16 : index
    %85 = memref.load %arg0[%c16] : memref<27xf32, #tpu.memory_space<smem>>
    %86 = vector.broadcast %85 : f32 to vector<32x128xf32>
    %87 = arith.select %84, %86, %67 : vector<32x128xi1>, vector<32x128xf32>
    %c17_i32 = arith.constant 17 : i32
    %88 = vector.broadcast %c17_i32 : i32 to vector<32x128xi32>
    %89 = arith.cmpi eq, %0, %88 : vector<32x128xi32>
    %c17 = arith.constant 17 : index
    %90 = memref.load %arg0[%c17] : memref<27xf32, #tpu.memory_space<smem>>
    %91 = vector.broadcast %90 : f32 to vector<32x128xf32>
    %92 = arith.select %89, %91, %72 : vector<32x128xi1>, vector<32x128xf32>
    %c18_i32 = arith.constant 18 : i32
    %93 = vector.broadcast %c18_i32 : i32 to vector<32x128xi32>
    %94 = arith.cmpi eq, %0, %93 : vector<32x128xi32>
    %c18 = arith.constant 18 : index
    %95 = memref.load %arg0[%c18] : memref<27xf32, #tpu.memory_space<smem>>
    %96 = vector.broadcast %95 : f32 to vector<32x128xf32>
    %97 = arith.select %94, %96, %77 : vector<32x128xi1>, vector<32x128xf32>
    %c19_i32 = arith.constant 19 : i32
    %98 = vector.broadcast %c19_i32 : i32 to vector<32x128xi32>
    %99 = arith.cmpi eq, %0, %98 : vector<32x128xi32>
    %c19 = arith.constant 19 : index
    %100 = memref.load %arg0[%c19] : memref<27xf32, #tpu.memory_space<smem>>
    %101 = vector.broadcast %100 : f32 to vector<32x128xf32>
    %102 = arith.select %99, %101, %82 : vector<32x128xi1>, vector<32x128xf32>
    %c20_i32 = arith.constant 20 : i32
    %103 = vector.broadcast %c20_i32 : i32 to vector<32x128xi32>
    %104 = arith.cmpi eq, %0, %103 : vector<32x128xi32>
    %c20 = arith.constant 20 : index
    %105 = memref.load %arg0[%c20] : memref<27xf32, #tpu.memory_space<smem>>
    %106 = vector.broadcast %105 : f32 to vector<32x128xf32>
    %107 = arith.select %104, %106, %87 : vector<32x128xi1>, vector<32x128xf32>
    %c21_i32 = arith.constant 21 : i32
    %108 = vector.broadcast %c21_i32 : i32 to vector<32x128xi32>
    %109 = arith.cmpi eq, %0, %108 : vector<32x128xi32>
    %c21 = arith.constant 21 : index
    %110 = memref.load %arg0[%c21] : memref<27xf32, #tpu.memory_space<smem>>
    %111 = vector.broadcast %110 : f32 to vector<32x128xf32>
    %112 = arith.select %109, %111, %92 : vector<32x128xi1>, vector<32x128xf32>
    %c22_i32 = arith.constant 22 : i32
    %113 = vector.broadcast %c22_i32 : i32 to vector<32x128xi32>
    %114 = arith.cmpi eq, %0, %113 : vector<32x128xi32>
    %c22 = arith.constant 22 : index
    %115 = memref.load %arg0[%c22] : memref<27xf32, #tpu.memory_space<smem>>
    %116 = vector.broadcast %115 : f32 to vector<32x128xf32>
    %117 = arith.select %114, %116, %97 : vector<32x128xi1>, vector<32x128xf32>
    %c23_i32 = arith.constant 23 : i32
    %118 = vector.broadcast %c23_i32 : i32 to vector<32x128xi32>
    %119 = arith.cmpi eq, %0, %118 : vector<32x128xi32>
    %c23 = arith.constant 23 : index
    %120 = memref.load %arg0[%c23] : memref<27xf32, #tpu.memory_space<smem>>
    %121 = vector.broadcast %120 : f32 to vector<32x128xf32>
    %122 = arith.select %119, %121, %102 : vector<32x128xi1>, vector<32x128xf32>
    %c24_i32 = arith.constant 24 : i32
    %123 = vector.broadcast %c24_i32 : i32 to vector<32x128xi32>
    %124 = arith.cmpi eq, %0, %123 : vector<32x128xi32>
    %c24 = arith.constant 24 : index
    %125 = memref.load %arg0[%c24] : memref<27xf32, #tpu.memory_space<smem>>
    %126 = vector.broadcast %125 : f32 to vector<32x128xf32>
    %127 = arith.select %124, %126, %107 : vector<32x128xi1>, vector<32x128xf32>
    %c25_i32 = arith.constant 25 : i32
    %128 = vector.broadcast %c25_i32 : i32 to vector<32x128xi32>
    %129 = arith.cmpi eq, %0, %128 : vector<32x128xi32>
    %c25 = arith.constant 25 : index
    %130 = memref.load %arg0[%c25] : memref<27xf32, #tpu.memory_space<smem>>
    %131 = vector.broadcast %130 : f32 to vector<32x128xf32>
    %132 = arith.select %129, %131, %112 : vector<32x128xi1>, vector<32x128xf32>
    %c26_i32 = arith.constant 26 : i32
    %133 = vector.broadcast %c26_i32 : i32 to vector<32x128xi32>
    %134 = arith.cmpi eq, %0, %133 : vector<32x128xi32>
    %c26 = arith.constant 26 : index
    %135 = memref.load %arg0[%c26] : memref<27xf32, #tpu.memory_space<smem>>
    %136 = vector.broadcast %135 : f32 to vector<32x128xf32>
    %137 = arith.select %134, %136, %117 : vector<32x128xi1>, vector<32x128xf32>
    %138 = arith.addf %127, %132 : vector<32x128xf32>
    %139 = arith.addf %137, %122 : vector<32x128xf32>
    %140 = arith.addf %138, %139 : vector<32x128xf32>
    %141 = vector.broadcast %1 : vector<32x1xf32> to vector<32x128xf32>
    %142 = arith.mulf %140, %141 : vector<32x128xf32>
    %cst_4 = arith.constant dense<0.000000e+00> : vector<128xf32>
    %143 = vector.multi_reduction <add>, %142, %cst_4 [0] : vector<32x128xf32> to vector<128xf32>
    %144 = vector.shape_cast %143 : vector<128xf32> to vector<1x128xf32>
    %cst_5 = arith.constant 3.000000e+00 : f32
    %145 = vector.broadcast %cst_5 : f32 to vector<1x128xf32>
    %146 = arith.cmpf ogt, %144, %145 : vector<1x128xf32>
    %cst_6 = arith.constant 6.000000e+00 : f32
    %147 = vector.broadcast %cst_6 : f32 to vector<1x128xf32>
    %148 = arith.mulf %144, %147 : vector<1x128xf32>
    %149 = arith.select %146, %144, %148 : vector<1x128xi1>, vector<1x128xf32>
    %c0_7 = arith.constant 0 : index
    %c0_8 = arith.constant 0 : index
    %150 = vector.load %arg3[%c0_7, %c0_8] : memref<1x128xf32, #tpu.memory_space<vmem>>, vector<1x128xf32>
    tpu.vector_store %arg3[%c0_7, %c0_8], %149 {strides = array<i32>} : memref<1x128xf32, #tpu.memory_space<vmem>>, vector<1x128xf32>,
    return
  }
}

</mosaic_0001>

<llo_original>
// kernel: squeeze.0
$region0: #{squeeze.0}
  %s0 = inlined_call_operand.vmem [shape: f32[125], index: 0, kind: input, shape index: {}]
  %s1 = inlined_call_operand.hbm [shape: f32[1,1,5,5,5], index: 1, kind: output, shape index: {}]
  $region1: #{squeeze.0} parent=0
    #allocation0 [shape = 'u8[12800]{0}', space=vmem, size = 0x3400, scoped, tag = 'operand span for operand 1']
    #allocation1 [shape = 's32[1]{0}', space=sflag, size = 0x4, scoped, tag = 'scoped memory for squeeze.0']
    #allocation2 [shape = 'u8[102400]{0}', space=vmem, size = 0x19000, scoped, tag = 'scoped mem for output reshape']
    #allocation3 [shape = 'u8[4096]{0}', space=vmem, size = 0x1000, scoped, tag = 'scoped mem for input reshape']
    %2 = vsyncpa [#allocation1], 0
    %s4 = ssub.s32 2, 1
    %v5 = vld [vmem:[%s0] sm:%s4]
    %6 = vst [vmem:[#allocation3] sm:%s4] %v5
    %v7 = vld [vmem:[#allocation3] sm:$0x1]
    %vm8 = vcmask 39936
    %9 = vst.msk [vmem:[#allocation2] sm:$0x1] %vm8, %v7
    %v10 = vld [vmem:[#allocation3] sm:$0x1]
    %11 = vrot.lane.b32.xlu0 %v10, 123
    %v12 = vpop.permute.xlu0 %11
    %vm13 = vcmask 39936
    %s14 = scalar_lea.vmem [#allocation2], 8
    %15 = vst.msk [vmem:[%s14] sm:$0x1] %vm13, %v12
    %v16 = vld [vmem:[#allocation3] sm:$0x1]
    %17 = vrot.lane.b32.xlu0 %v16, 118
    %v18 = vpop.permute.xlu0 %17
    %vm19 = vcmask 39936
    %s20 = scalar_lea.vmem [#allocation2], 16
    %21 = vst.msk [vmem:[%s20] sm:$0x1] %vm19, %v18
    %v22 = vld [vmem:[#allocation3] sm:$0x1]
    %23 = vrot.lane.b32.xlu0 %v22, 113
    %v24 = vpop.permute.xlu0 %23
    %vm25 = vcmask 39936
    %s26 = scalar_lea.vmem [#allocation2], 24
    %27 = vst.msk [vmem:[%s26] sm:$0x1] %vm25, %v24
    %v28 = vld [vmem:[#allocation3] sm:$0x1]
    %29 = vrot.lane.b32.xlu0 %v28, 108
    %v30 = vpop.permute.xlu0 %29
    %vm31 = vcmask 39936
    %s32 = scalar_lea.vmem [#allocation2], 32
    %33 = vst.msk [vmem:[%s32] sm:$0x1] %vm31, %v30
    %v34 = vld [vmem:[#allocation3] sm:$0x1]
    %35 = vrot.lane.b32.xlu0 %v34, 103
    %v36 = vpop.permute.xlu0 %35
    %vm37 = vcmask 39936
    %s38 = scalar_lea.vmem [#allocation2], 40
    %39 = vst.msk [vmem:[%s38] sm:$0x1] %vm37, %v36
    %v40 = vld [vmem:[#allocation3] sm:$0x1]
    %41 = vrot.lane.b32.xlu0 %v40, 98
    %v42 = vpop.permute.xlu0 %41
    %vm43 = vcmask 39936
    %s44 = scalar_lea.vmem [#allocation2], 48
    %45 = vst.msk [vmem:[%s44] sm:$0x1] %vm43, %v42
    %v46 = vld [vmem:[#allocation3] sm:$0x1]
    %47 = vrot.lane.b32.xlu0 %v46, 93
    %v48 = vpop.permute.xlu0 %47
    %vm49 = vcmask 39936
    %s50 = scalar_lea.vmem [#allocation2], 56
    %51 = vst.msk [vmem:[%s50] sm:$0x1] %vm49, %v48
    %v52 = vld [vmem:[#allocation3] sm:$0x1]
    %53 = vrot.lane.b32.xlu0 %v52, 88
    %v54 = vpop.permute.xlu0 %53
    %vm55 = vcmask 39936
    %s56 = scalar_lea.vmem [#allocation2], 64
    %57 = vst.msk [vmem:[%s56] sm:$0x1] %vm55, %v54
    %v58 = vld [vmem:[#allocation3] sm:$0x1]
    %59 = vrot.lane.b32.xlu0 %v58, 83
    %v60 = vpop.permute.xlu0 %59
    %vm61 = vcmask 39936
    %s62 = scalar_lea.vmem [#allocation2], 72
    %63 = vst.msk [vmem:[%s62] sm:$0x1] %vm61, %v60
    %v64 = vld [vmem:[#allocation3] sm:$0x1]
    %65 = vrot.lane.b32.xlu0 %v64, 78
    %v66 = vpop.permute.xlu0 %65
    %vm67 = vcmask 39936
    %s68 = scalar_lea.vmem [#allocation2], 80
    %69 = vst.msk [vmem:[%s68] sm:$0x1] %vm67, %v66
    %v70 = vld [vmem:[#allocation3] sm:$0x1]
    %71 = vrot.lane.b32.xlu0 %v70, 73
    %v72 = vpop.permute.xlu0 %71
    %vm73 = vcmask 39936
    %s74 = scalar_lea.vmem [#allocation2], 88
    %75 = vst.msk [vmem:[%s74] sm:$0x1] %vm73, %v72
    %v76 = vld [vmem:[#allocation3] sm:$0x1]
    %77 = vrot.lane.b32.xlu0 %v76, 68
    %v78 = vpop.permute.xlu0 %77
    %vm79 = vcmask 39936
    %s80 = scalar_lea.vmem [#allocation2], 96
    %81 = vst.msk [vmem:[%s80] sm:$0x1] %vm79, %v78
    %v82 = vld [vmem:[#allocation3] sm:$0x1]
    %83 = vrot.lane.b32.xlu0 %v82, 63
    %v84 = vpop.permute.xlu0 %83
    %vm85 = vcmask 39936
    %s86 = scalar_lea.vmem [#allocation2], 104
    %87 = vst.msk [vmem:[%s86] sm:$0x1] %vm85, %v84
    %v88 = vld [vmem:[#allocation3] sm:$0x1]
    %89 = vrot.lane.b32.xlu0 %v88, 58
    %v90 = vpop.permute.xlu0 %89
    %vm91 = vcmask 39936
    %s92 = scalar_lea.vmem [#allocation2], 112
    %93 = vst.msk [vmem:[%s92] sm:$0x1] %vm91, %v90
    %v94 = vld [vmem:[#allocation3] sm:$0x1]
    %95 = vrot.lane.b32.xlu0 %v94, 53
    %v96 = vpop.permute.xlu0 %95
    %vm97 = vcmask 39936
    %s98 = scalar_lea.vmem [#allocation2], 120
    %99 = vst.msk [vmem:[%s98] sm:$0x1] %vm97, %v96
    %v100 = vld [vmem:[#allocation3] sm:$0x1]
    %101 = vrot.lane.b32.xlu0 %v100, 48
    %v102 = vpop.permute.xlu0 %101
    %vm103 = vcmask 39936
    %s104 = scalar_lea.vmem [#allocation2], 128
    %105 = vst.msk [vmem:[%s104] sm:$0x1] %vm103, %v102
    %v106 = vld [vmem:[#allocation3] sm:$0x1]
    %107 = vrot.lane.b32.xlu0 %v106, 43
    %v108 = vpop.permute.xlu0 %107
    %vm109 = vcmask 39936
    %s110 = scalar_lea.vmem [#allocation2], 136
    %111 = vst.msk [vmem:[%s110] sm:$0x1] %vm109, %v108
    %v112 = vld [vmem:[#allocation3] sm:$0x1]
    %113 = vrot.lane.b32.xlu0 %v112, 38
    %v114 = vpop.permute.xlu0 %113
    %vm115 = vcmask 39936
    %s116 = scalar_lea.vmem [#allocation2], 144
    %117 = vst.msk [vmem:[%s116] sm:$0x1] %vm115, %v114
    %v118 = vld [vmem:[#allocation3] sm:$0x1]
    %119 = vrot.lane.b32.xlu0 %v118, 33
    %v120 = vpop.permute.xlu0 %119
    %vm121 = vcmask 39936
    %s122 = scalar_lea.vmem [#allocation2], 152
    %123 = vst.msk [vmem:[%s122] sm:$0x1] %vm121, %v120
    %v124 = vld [vmem:[#allocation3] sm:$0x1]
    %125 = vrot.lane.b32.xlu0 %v124, 28
    %v126 = vpop.permute.xlu0 %125
    %vm127 = vcmask 39936
    %s128 = scalar_lea.vmem [#allocation2], 160
    %129 = vst.msk [vmem:[%s128] sm:$0x1] %vm127, %v126
    %v130 = vld [vmem:[#allocation3] sm:$0x1]
    %131 = vrot.lane.b32.xlu0 %v130, 23
    %v132 = vpop.permute.xlu0 %131
    %vm133 = vcmask 39936
    %s134 = scalar_lea.vmem [#allocation2], 168
    %135 = vst.msk [vmem:[%s134] sm:$0x1] %vm133, %v132
    %v136 = vld [vmem:[#allocation3] sm:$0x1]
    %137 = vrot.lane.b32.xlu0 %v136, 18
    %v138 = vpop.permute.xlu0 %137
    %vm139 = vcmask 39936
    %s140 = scalar_lea.vmem [#allocation2], 176
    %141 = vst.msk [vmem:[%s140] sm:$0x1] %vm139, %v138
    %v142 = vld [vmem:[#allocation3] sm:$0x1]
    %143 = vrot.lane.b32.xlu0 %v142, 13
    %v144 = vpop.permute.xlu0 %143
    %vm145 = vcmask 39936
    %s146 = scalar_lea.vmem [#allocation2], 184
    %147 = vst.msk [vmem:[%s146] sm:$0x1] %vm145, %v144
    %v148 = vld [vmem:[#allocation3] sm:$0x1]
    %149 = vrot.lane.b32.xlu0 %v148, 8
    %v150 = vpop.permute.xlu0 %149
    %vm151 = vcmask 39936
    %s152 = scalar_lea.vmem [#allocation2], 192
    %153 = vst.msk [vmem:[%s152] sm:$0x1] %vm151, %v150
    %s155 = ssub.s32 2, 1
    %v156 = vld [vmem:[#allocation2] sm:%s155]
    %s158 = ssub.s32 2, 1
    %159 = vst [vmem:[#allocation0] sm:%s158] %v156
    %s160 = scalar_lea.vmem [#allocation2], 8
    %v161 = vld [vmem:[%s160] sm:%s155]
    %s163 = ssub.s32 2, 1
    %s164 = scalar_lea.vmem [#allocation0], 1
    %165 = vst [vmem:[%s164] sm:%s163] %v161
    %s166 = scalar_lea.vmem [#allocation2], 16
    %v167 = vld [vmem:[%s166] sm:%s155]
    %s169 = ssub.s32 2, 1
    %s170 = scalar_lea.vmem [#allocation0], 2
    %171 = vst [vmem:[%s170] sm:%s169] %v167
    %s172 = scalar_lea.vmem [#allocation2], 24
    %v173 = vld [vmem:[%s172] sm:%s155]
    %s175 = ssub.s32 2, 1
    %s176 = scalar_lea.vmem [#allocation0], 3
    %177 = vst [vmem:[%s176] sm:%s175] %v173
    %s178 = scalar_lea.vmem [#allocation2], 32
    %v179 = vld [vmem:[%s178] sm:%s155]
    %s181 = ssub.s32 2, 1
    %s182 = scalar_lea.vmem [#allocation0], 4
    %183 = vst [vmem:[%s182] sm:%s181] %v179
    %s184 = scalar_lea.vmem [#allocation2], 40
    %v185 = vld [vmem:[%s184] sm:%s155]
    %s187 = ssub.s32 2, 1
    %s188 = scalar_lea.vmem [#allocation0], 5
    %189 = vst [vmem:[%s188] sm:%s187] %v185
    %s190 = scalar_lea.vmem [#allocation2], 48
    %v191 = vld [vmem:[%s190] sm:%s155]
    %s193 = ssub.s32 2, 1
    %s194 = scalar_lea.vmem [#allocation0], 6
    %195 = vst [vmem:[%s194] sm:%s193] %v191
    %s196 = scalar_lea.vmem [#allocation2], 56
    %v197 = vld [vmem:[%s196] sm:%s155]
    %s199 = ssub.s32 2, 1
    %s200 = scalar_lea.vmem [#allocation0], 7
    %201 = vst [vmem:[%s200] sm:%s199] %v197
    %s202 = scalar_lea.vmem [#allocation2], 64
    %v203 = vld [vmem:[%s202] sm:%s155]
    %s205 = ssub.s32 2, 1
    %s206 = scalar_lea.vmem [#allocation0], 8
    %207 = vst [vmem:[%s206] sm:%s205] %v203
    %s208 = scalar_lea.vmem [#allocation2], 72
    %v209 = vld [vmem:[%s208] sm:%s155]
    %s211 = ssub.s32 2, 1
    %s212 = scalar_lea.vmem [#allocation0], 9
    %213 = vst [vmem:[%s212] sm:%s211] %v209
    %s214 = scalar_lea.vmem [#allocation2], 80
    %v215 = vld [vmem:[%s214] sm:%s155]
    %s217 = ssub.s32 2, 1
    %s218 = scalar_lea.vmem [#allocation0], 10
    %219 = vst [vmem:[%s218] sm:%s217] %v215
    %s220 = scalar_lea.vmem [#allocation2], 88
    %v221 = vld [vmem:[%s220] sm:%s155]
    %s223 = ssub.s32 2, 1
    %s224 = scalar_lea.vmem [#allocation0], 11
    %225 = vst [vmem:[%s224] sm:%s223] %v221
    %s226 = scalar_lea.vmem [#allocation2], 96
    %v227 = vld [vmem:[%s226] sm:%s155]
    %s229 = ssub.s32 2, 1
    %s230 = scalar_lea.vmem [#allocation0], 12
    %231 = vst [vmem:[%s230] sm:%s229] %v227
    %s232 = scalar_lea.vmem [#allocation2], 104
    %v233 = vld [vmem:[%s232] sm:%s155]
    %s235 = ssub.s32 2, 1
    %s236 = scalar_lea.vmem [#allocation0], 13
    %237 = vst [vmem:[%s236] sm:%s235] %v233
    %s238 = scalar_lea.vmem [#allocation2], 112
    %v239 = vld [vmem:[%s238] sm:%s155]
    %s241 = ssub.s32 2, 1
    %s242 = scalar_lea.vmem [#allocation0], 14
    %243 = vst [vmem:[%s242] sm:%s241] %v239
    %s244 = scalar_lea.vmem [#allocation2], 120
    %v245 = vld [vmem:[%s244] sm:%s155]
    %s247 = ssub.s32 2, 1
    %s248 = scalar_lea.vmem [#allocation0], 15
    %249 = vst [vmem:[%s248] sm:%s247] %v245
    %s250 = scalar_lea.vmem [#allocation2], 128
    %v251 = vld [vmem:[%s250] sm:%s155]
    %s253 = ssub.s32 2, 1
    %s254 = scalar_lea.vmem [#allocation0], 16
    %255 = vst [vmem:[%s254] sm:%s253] %v251
    %s256 = scalar_lea.vmem [#allocation2], 136
    %v257 = vld [vmem:[%s256] sm:%s155]
    %s259 = ssub.s32 2, 1
    %s260 = scalar_lea.vmem [#allocation0], 17
    %261 = vst [vmem:[%s260] sm:%s259] %v257
    %s262 = scalar_lea.vmem [#allocation2], 144
    %v263 = vld [vmem:[%s262] sm:%s155]
    %s265 = ssub.s32 2, 1
    %s266 = scalar_lea.vmem [#allocation0], 18
    %267 = vst [vmem:[%s266] sm:%s265] %v263
    %s268 = scalar_lea.vmem [#allocation2], 152
    %v269 = vld [vmem:[%s268] sm:%s155]
    %s271 = ssub.s32 2, 1
    %s272 = scalar_lea.vmem [#allocation0], 19
    %273 = vst [vmem:[%s272] sm:%s271] %v269
    %s274 = scalar_lea.vmem [#allocation2], 160
    %v275 = vld [vmem:[%s274] sm:%s155]
    %s277 = ssub.s32 2, 1
    %s278 = scalar_lea.vmem [#allocation0], 20
    %279 = vst [vmem:[%s278] sm:%s277] %v275
    %s280 = scalar_lea.vmem [#allocation2], 168
    %v281 = vld [vmem:[%s280] sm:%s155]
    %s283 = ssub.s32 2, 1
    %s284 = scalar_lea.vmem [#allocation0], 21
    %285 = vst [vmem:[%s284] sm:%s283] %v281
    %s286 = scalar_lea.vmem [#allocation2], 176
    %v287 = vld [vmem:[%s286] sm:%s155]
    %s289 = ssub.s32 2, 1
    %s290 = scalar_lea.vmem [#allocation0], 22
    %291 = vst [vmem:[%s290] sm:%s289] %v287
    %s292 = scalar_lea.vmem [#allocation2], 184
    %v293 = vld [vmem:[%s292] sm:%s155]
    %s295 = ssub.s32 2, 1
    %s296 = scalar_lea.vmem [#allocation0], 23
    %297 = vst [vmem:[%s296] sm:%s295] %v293
    %s298 = scalar_lea.vmem [#allocation2], 192
    %v299 = vld [vmem:[%s298] sm:%s155]
    %s301 = ssub.s32 2, 1
    %s302 = scalar_lea.vmem [#allocation0], 24
    %303 = vst [vmem:[%s302] sm:%s301] %v299
    %305 = vsyncadd [#allocation1], 0
    %s307 = sshll.u32 [#allocation0], 4
    %s308 = int_to_ptr.vmem [resolvable:$true] %s307
    %s309 = sshll.u32 %s1, 4
    %s310 = int_to_ptr.hbm [resolvable:$true] %s309
    %312 = dma.vmem_to_hbm [thread:$0]  %s308, 400, %s310, [#allocation1]
    %314 = dma.done [#allocation1], 400
    %315 = vsyncpa [#allocation1], 1

// kernel: model_forward.1
$region0: #{model_forward.1}
  #allocation0 [shape = 'u32[]', space=smem, size = 0x4, offset = 0x4, fixed_abs, tag = 'smem constant byte address 0x4 - core index']
  #allocation1 [shape = 'u32[72,128]{1,0:T(1,128)}', space=vmem, size = 0x9000, scoped, tag = 'internal scratch']
  %s0 = inlined_call_operand.vmem [shape: f32[27], index: 0, kind: input, shape index: {}]
  %s1 = inlined_call_operand.vmem [shape: s32[32,128], index: 1, kind: input, shape index: {}]
  %s2 = inlined_call_operand.vmem [shape: f32[32,1], index: 2, kind: input, shape index: {}]
  %s3 = inlined_call_operand.vmem [shape: f32[1,128], index: 3, kind: output, shape index: {}]
  %s4 = sld [smem:[#allocation0]]
  $region26: #{model_forward.1} parent=0
    _
  %s6 = ssub.s32 1, %s4
  %s7 = scalar_select 0, %s6, %s4
  $region1: #{model_forward.1} parent=0
    #allocation2 [shape = 'u8[512]{0}', space=smem, size = 0x200, scoped, tag = 'input window, operand 0, single buffered']
    #allocation3 [shape = 's32[1]{0}', space=sflag, size = 0x4, scoped, tag = 'scoped memory for model_forward.1']
    %8 = vsyncpa [#allocation3], 0
    // Predicated region
    $region2: #{model_forward.1} parent=1 // pred_check
      _
    $region3: #{model_forward.1} parent=1 // pred_check_branch
      %10 = sbr.rel (0) target = $region5
    $region4: #{model_forward.1} parent=1 // pred_region
      %12 = vsyncadd [#allocation3], 0
      %s14 = sshll.u32 %s0, 4
      %s15 = int_to_ptr.vmem [resolvable:$true] %s14
      %17 = dma.vmem_to_smem %s15, 16, [#allocation2], [#allocation3]
    $region5: #{model_forward.1} parent=1 // pred_fallthru
      _
    // Predicated region
    $region6: #{model_forward.1} parent=1 // pred_check
      _
    $region7: #{model_forward.1} parent=1 // pred_check_branch
      %19 = sbr.rel (0) target = $region9
    $region8: #{model_forward.1} parent=1 // pred_region
      _
    $region9: #{model_forward.1} parent=1 // pred_fallthru
      _
    // Predicated region
    $region10: #{model_forward.1} parent=1 // pred_check
      _
    $region11: #{model_forward.1} parent=1 // pred_check_branch
      %21 = sbr.rel (0) target = $region13
    $region12: #{model_forward.1} parent=1 // pred_region
      _
    $region13: #{model_forward.1} parent=1 // pred_fallthru
      _
    // Predicated region
    $region14: #{model_forward.1} parent=1 // pred_check
      _
    $region15: #{model_forward.1} parent=1 // pred_check_branch
      %23 = sbr.rel (0) target = $region17
    $region16: #{model_forward.1} parent=1 // pred_region
      %25 = dma.done [#allocation3], 16
    $region17: #{model_forward.1} parent=1 // pred_fallthru
      _
    %26 = sfence
    %v27 = vld [vmem:[%s1] sm:$0xff]
    %v28 = vld [vmem:[%s1 + $0x8] sm:$0xff]
    %v29 = vld [vmem:[%s1 + $0x10] sm:$0xff]
    %v30 = vld [vmem:[%s1 + $0x18] sm:$0xff]
    %v31 = vld [vmem:[%s2] sm:$0xff]
    %v32 = vld [vmem:[%s2 + $0x8] sm:$0xff]
    %v33 = vld [vmem:[%s2 + $0x10] sm:$0xff]
    %v34 = vld [vmem:[%s2 + $0x18] sm:$0xff]
    %vm35 = vcmp.eq.s32.totalorder %v27, 0
    %vm36 = vcmp.eq.s32.totalorder %v28, 0
    %vm37 = vcmp.eq.s32.totalorder %v29, 0
    %vm38 = vcmp.eq.s32.totalorder %v30, 0
    %s39 = sld [smem:[#allocation2]]
    %v40 = vstv %s39
    %v41 = vsel %vm35, %v40, 0.0
    %v42 = vsel %vm36, %v40, 0.0
    %v43 = vsel %vm37, %v40, 0.0
    %v44 = vsel %vm38, %v40, 0.0
    %vm45 = vcmp.eq.s32.totalorder %v27, 1
    %vm46 = vcmp.eq.s32.totalorder %v28, 1
    %vm47 = vcmp.eq.s32.totalorder %v29, 1
    %vm48 = vcmp.eq.s32.totalorder %v30, 1
    %s49 = sld [smem:[#allocation2 + $0x1]]
    %v50 = vstv %s49
    %v51 = vsel %vm45, %v50, 0.0
    %v52 = vsel %vm46, %v50, 0.0
    %v53 = vsel %vm47, %v50, 0.0
    %v54 = vsel %vm48, %v50, 0.0
    %vm55 = vcmp.eq.s32.totalorder %v27, 2
    %vm56 = vcmp.eq.s32.totalorder %v28, 2
    %vm57 = vcmp.eq.s32.totalorder %v29, 2
    %vm58 = vcmp.eq.s32.totalorder %v30, 2
    %s59 = sld [smem:[#allocation2 + $0x2]]
    %v60 = vstv %s59
    %v61 = vsel %vm55, %v60, 0.0
    %v62 = vsel %vm56, %v60, 0.0
    %v63 = vsel %vm57, %v60, 0.0
    %v64 = vsel %vm58, %v60, 0.0
    %vm65 = vcmp.eq.s32.totalorder %v27, 3
    %vm66 = vcmp.eq.s32.totalorder %v28, 3
    %vm67 = vcmp.eq.s32.totalorder %v29, 3
    %vm68 = vcmp.eq.s32.totalorder %v30, 3
    %s69 = sld [smem:[#allocation2 + $0x3]]
    %v70 = vstv %s69
    %v71 = vsel %vm65, %v70, 0.0
    %v72 = vsel %vm66, %v70, 0.0
    %v73 = vsel %vm67, %v70, 0.0
    %v74 = vsel %vm68, %v70, 0.0
    %vm75 = vcmp.eq.s32.totalorder %v27, 4
    %vm76 = vcmp.eq.s32.totalorder %v28, 4
    %vm77 = vcmp.eq.s32.totalorder %v29, 4
    %vm78 = vcmp.eq.s32.totalorder %v30, 4
    %s79 = sld [smem:[#allocation2 + $0x4]]
    %v80 = vstv %s79
    %v81 = vsel %vm75, %v80, %v41
    %v82 = vsel %vm76, %v80, %v42
    %v83 = vsel %vm77, %v80, %v43
    %v84 = vsel %vm78, %v80, %v44
    %vm85 = vcmp.eq.s32.totalorder %v27, 5
    %vm86 = vcmp.eq.s32.totalorder %v28, 5
    %vm87 = vcmp.eq.s32.totalorder %v29, 5
    %vm88 = vcmp.eq.s32.totalorder %v30, 5
    %s89 = sld [smem:[#allocation2 + $0x5]]
    %v90 = vstv %s89
    %v91 = vsel %vm85, %v90, %v51
    %v92 = vsel %vm86, %v90, %v52
    %v93 = vsel %vm87, %v90, %v53
    %v94 = vsel %vm88, %v90, %v54
    %vm95 = vcmp.eq.s32.totalorder %v27, 6
    %vm96 = vcmp.eq.s32.totalorder %v28, 6
    %vm97 = vcmp.eq.s32.totalorder %v29, 6
    %vm98 = vcmp.eq.s32.totalorder %v30, 6
    %s99 = sld [smem:[#allocation2 + $0x6]]
    %v100 = vstv %s99
    %v101 = vsel %vm95, %v100, %v61
    %v102 = vsel %vm96, %v100, %v62
    %v103 = vsel %vm97, %v100, %v63
    %v104 = vsel %vm98, %v100, %v64
    %vm105 = vcmp.eq.s32.totalorder %v27, 7
    %vm106 = vcmp.eq.s32.totalorder %v28, 7
    %vm107 = vcmp.eq.s32.totalorder %v29, 7
    %vm108 = vcmp.eq.s32.totalorder %v30, 7
    %s109 = sld [smem:[#allocation2 + $0x7]]
    %v110 = vstv %s109
    %v111 = vsel %vm105, %v110, %v71
    %v112 = vsel %vm106, %v110, %v72
    %v113 = vsel %vm107, %v110, %v73
    %v114 = vsel %vm108, %v110, %v74
    %vm115 = vcmp.eq.s32.totalorder %v27, 8
    %vm116 = vcmp.eq.s32.totalorder %v28, 8
    %vm117 = vcmp.eq.s32.totalorder %v29, 8
    %vm118 = vcmp.eq.s32.totalorder %v30, 8
    %s119 = sld [smem:[#allocation2 + $0x8]]
    %v120 = vstv %s119
    %v121 = vsel %vm115, %v120, %v81
    %v122 = vsel %vm116, %v120, %v82
    %v123 = vsel %vm117, %v120, %v83
    %v124 = vsel %vm118, %v120, %v84
    %vm125 = vcmp.eq.s32.totalorder %v27, 9
    %vm126 = vcmp.eq.s32.totalorder %v28, 9
    %vm127 = vcmp.eq.s32.totalorder %v29, 9
    %vm128 = vcmp.eq.s32.totalorder %v30, 9
    %s129 = sld [smem:[#allocation2 + $0x9]]
    %v130 = vstv %s129
    %v131 = vsel %vm125, %v130, %v91
    %v132 = vsel %vm126, %v130, %v92
    %v133 = vsel %vm127, %v130, %v93
    %v134 = vsel %vm128, %v130, %v94
    %vm135 = vcmp.eq.s32.totalorder %v27, 10
    %vm136 = vcmp.eq.s32.totalorder %v28, 10
    %vm137 = vcmp.eq.s32.totalorder %v29, 10
    %vm138 = vcmp.eq.s32.totalorder %v30, 10
    %s139 = sld [smem:[#allocation2 + $0xa]]
    %v140 = vstv %s139
    %v141 = vsel %vm135, %v140, %v101
    %v142 = vsel %vm136, %v140, %v102
    %v143 = vsel %vm137, %v140, %v103
    %v144 = vsel %vm138, %v140, %v104
    %vm145 = vcmp.eq.s32.totalorder %v27, 11
    %vm146 = vcmp.eq.s32.totalorder %v28, 11
    %vm147 = vcmp.eq.s32.totalorder %v29, 11
    %vm148 = vcmp.eq.s32.totalorder %v30, 11
    %s149 = sld [smem:[#allocation2 + $0xb]]
    %v150 = vstv %s149
    %v151 = vsel %vm145, %v150, %v111
    %v152 = vsel %vm146, %v150, %v112
    %v153 = vsel %vm147, %v150, %v113
    %v154 = vsel %vm148, %v150, %v114
    %vm155 = vcmp.eq.s32.totalorder %v27, 12
    %vm156 = vcmp.eq.s32.totalorder %v28, 12
    %vm157 = vcmp.eq.s32.totalorder %v29, 12
    %vm158 = vcmp.eq.s32.totalorder %v30, 12
    %s159 = sld [smem:[#allocation2 + $0xc]]
    %v160 = vstv %s159
    %v161 = vsel %vm155, %v160, %v121
    %v162 = vsel %vm156, %v160, %v122
    %v163 = vsel %vm157, %v160, %v123
    %v164 = vsel %vm158, %v160, %v124
    %vm165 = vcmp.eq.s32.totalorder %v27, 13
    %vm166 = vcmp.eq.s32.totalorder %v28, 13
    %vm167 = vcmp.eq.s32.totalorder %v29, 13
    %vm168 = vcmp.eq.s32.totalorder %v30, 13
    %s169 = sld [smem:[#allocation2 + $0xd]]
    %v170 = vstv %s169
    %v171 = vsel %vm165, %v170, %v131
    %v172 = vsel %vm166, %v170, %v132
    %v173 = vsel %vm167, %v170, %v133
    %v174 = vsel %vm168, %v170, %v134
    %vm175 = vcmp.eq.s32.totalorder %v27, 14
    %vm176 = vcmp.eq.s32.totalorder %v28, 14
    %vm177 = vcmp.eq.s32.totalorder %v29, 14
    %vm178 = vcmp.eq.s32.totalorder %v30, 14
    %s179 = sld [smem:[#allocation2 + $0xe]]
    %v180 = vstv %s179
    %v181 = vsel %vm175, %v180, %v141
    %v182 = vsel %vm176, %v180, %v142
    %v183 = vsel %vm177, %v180, %v143
    %v184 = vsel %vm178, %v180, %v144
    %vm185 = vcmp.eq.s32.totalorder %v27, 15
    %vm186 = vcmp.eq.s32.totalorder %v28, 15
    %vm187 = vcmp.eq.s32.totalorder %v29, 15
    %vm188 = vcmp.eq.s32.totalorder %v30, 15
    %s189 = sld [smem:[#allocation2 + $0xf]]
    %v190 = vstv %s189
    %v191 = vsel %vm185, %v190, %v151
    %v192 = vsel %vm186, %v190, %v152
    %v193 = vsel %vm187, %v190, %v153
    %v194 = vsel %vm188, %v190, %v154
    %vm195 = vcmp.eq.s32.totalorder %v27, 16
    %vm196 = vcmp.eq.s32.totalorder %v28, 16
    %vm197 = vcmp.eq.s32.totalorder %v29, 16
    %vm198 = vcmp.eq.s32.totalorder %v30, 16
    %s199 = sld [smem:[#allocation2 + $0x10]]
    %v200 = vstv %s199
    %v201 = vsel %vm195, %v200, %v161
    %v202 = vsel %vm196, %v200, %v162
    %v203 = vsel %vm197, %v200, %v163
    %v204 = vsel %vm198, %v200, %v164
    %vm205 = vcmp.eq.s32.totalorder %v27, 17
    %vm206 = vcmp.eq.s32.totalorder %v28, 17
    %vm207 = vcmp.eq.s32.totalorder %v29, 17
    %vm208 = vcmp.eq.s32.totalorder %v30, 17
    %s209 = sld [smem:[#allocation2 + $0x11]]
    %v210 = vstv %s209
    %v211 = vsel %vm205, %v210, %v171
    %v212 = vsel %vm206, %v210, %v172
    %v213 = vsel %vm207, %v210, %v173
    %v214 = vsel %vm208, %v210, %v174
    %vm215 = vcmp.eq.s32.totalorder %v27, 18
    %vm216 = vcmp.eq.s32.totalorder %v28, 18
    %vm217 = vcmp.eq.s32.totalorder %v29, 18
    %vm218 = vcmp.eq.s32.totalorder %v30, 18
    %s219 = sld [smem:[#allocation2 + $0x12]]
    %v220 = vstv %s219
    %v221 = vsel %vm215, %v220, %v181
    %v222 = vsel %vm216, %v220, %v182
    %v223 = vsel %vm217, %v220, %v183
    %v224 = vsel %vm218, %v220, %v184
    %vm225 = vcmp.eq.s32.totalorder %v27, 19
    %vm226 = vcmp.eq.s32.totalorder %v28, 19
    %vm227 = vcmp.eq.s32.totalorder %v29, 19
    %vm228 = vcmp.eq.s32.totalorder %v30, 19
    %s229 = sld [smem:[#allocation2 + $0x13]]
    %v230 = vstv %s229
    %v231 = vsel %vm225, %v230, %v191
    %v232 = vsel %vm226, %v230, %v192
    %v233 = vsel %vm227, %v230, %v193
    %v234 = vsel %vm228, %v230, %v194
    %vm235 = vcmp.eq.s32.totalorder %v27, 20
    %vm236 = vcmp.eq.s32.totalorder %v28, 20
    %vm237 = vcmp.eq.s32.totalorder %v29, 20
    %vm238 = vcmp.eq.s32.totalorder %v30, 20
    %s239 = sld [smem:[#allocation2 + $0x14]]
    %v240 = vstv %s239
    %v241 = vsel %vm235, %v240, %v201
    %v242 = vsel %vm236, %v240, %v202
    %v243 = vsel %vm237, %v240, %v203
    %v244 = vsel %vm238, %v240, %v204
    %vm245 = vcmp.eq.s32.totalorder %v27, 21
    %vm246 = vcmp.eq.s32.totalorder %v28, 21
    %vm247 = vcmp.eq.s32.totalorder %v29, 21
    %vm248 = vcmp.eq.s32.totalorder %v30, 21
    %s249 = sld [smem:[#allocation2 + $0x15]]
    %v250 = vstv %s249
    %v251 = vsel %vm245, %v250, %v211
    %v252 = vsel %vm246, %v250, %v212
    %v253 = vsel %vm247, %v250, %v213
    %v254 = vsel %vm248, %v250, %v214
    %vm255 = vcmp.eq.s32.totalorder %v27, 22
    %vm256 = vcmp.eq.s32.totalorder %v28, 22
    %vm257 = vcmp.eq.s32.totalorder %v29, 22
    %vm258 = vcmp.eq.s32.totalorder %v30, 22
    %s259 = sld [smem:[#allocation2 + $0x16]]
    %v260 = vstv %s259
    %v261 = vsel %vm255, %v260, %v221
    %v262 = vsel %vm256, %v260, %v222
    %v263 = vsel %vm257, %v260, %v223
    %v264 = vsel %vm258, %v260, %v224
    %vm265 = vcmp.eq.s32.totalorder %v27, 23
    %vm266 = vcmp.eq.s32.totalorder %v28, 23
    %vm267 = vcmp.eq.s32.totalorder %v29, 23
    %vm268 = vcmp.eq.s32.totalorder %v30, 23
    %s269 = sld [smem:[#allocation2 + $0x17]]
    %v270 = vstv %s269
    %v271 = vsel %vm265, %v270, %v231
    %v272 = vsel %vm266, %v270, %v232
    %v273 = vsel %vm267, %v270, %v233
    %v274 = vsel %vm268, %v270, %v234
    %vm275 = vcmp.eq.s32.totalorder %v27, 24
    %vm276 = vcmp.eq.s32.totalorder %v28, 24
    %vm277 = vcmp.eq.s32.totalorder %v29, 24
    %vm278 = vcmp.eq.s32.totalorder %v30, 24
    %s279 = sld [smem:[#allocation2 + $0x18]]
    %v280 = vstv %s279
    %v281 = vsel %vm275, %v280, %v241
    %v282 = vsel %vm276, %v280, %v242
    %v283 = vsel %vm277, %v280, %v243
    %v284 = vsel %vm278, %v280, %v244
    %vm285 = vcmp.eq.s32.totalorder %v27, 25
    %vm286 = vcmp.eq.s32.totalorder %v28, 25
    %vm287 = vcmp.eq.s32.totalorder %v29, 25
    %vm288 = vcmp.eq.s32.totalorder %v30, 25
    %s289 = sld [smem:[#allocation2 + $0x19]]
    %v290 = vstv %s289
    %v291 = vsel %vm285, %v290, %v251
    %v292 = vsel %vm286, %v290, %v252
    %v293 = vsel %vm287, %v290, %v253
    %v294 = vsel %vm288, %v290, %v254
    %vm295 = vcmp.eq.s32.totalorder %v27, 26
    %vm296 = vcmp.eq.s32.totalorder %v28, 26
    %vm297 = vcmp.eq.s32.totalorder %v29, 26
    %vm298 = vcmp.eq.s32.totalorder %v30, 26
    %s299 = sld [smem:[#allocation2 + $0x1a]]
    %v300 = vstv %s299
    %v301 = vsel %vm295, %v300, %v261
    %v302 = vsel %vm296, %v300, %v262
    %v303 = vsel %vm297, %v300, %v263
    %v304 = vsel %vm298, %v300, %v264
    %v305 = vadd.f32 %v281, %v291
    %v306 = vadd.f32 %v282, %v292
    %v307 = vadd.f32 %v283, %v293
    %v308 = vadd.f32 %v284, %v294
    %v309 = vadd.f32 %v301, %v271
    %v310 = vadd.f32 %v302, %v272
    %v311 = vadd.f32 %v303, %v273
    %v312 = vadd.f32 %v304, %v274
    %v313 = vadd.f32 %v305, %v309
    %v314 = vadd.f32 %v306, %v310
    %v315 = vadd.f32 %v307, %v311
    %v316 = vadd.f32 %v308, %v312
    %318 = vset.pattern.permute.xlu0 0
    %319 = vperm.xlu0 %318, %v31
    %v320 = vpop.permute.xlu0 %319
    %323 = vset.pattern.permute.xlu0 0
    %324 = vperm.xlu0 %323, %v32
    %v325 = vpop.permute.xlu0 %324
    %328 = vset.pattern.permute.xlu0 0
    %329 = vperm.xlu0 %328, %v33
    %v330 = vpop.permute.xlu0 %329
    %333 = vset.pattern.permute.xlu0 0
    %334 = vperm.xlu0 %333, %v34
    %v335 = vpop.permute.xlu0 %334
    %v337 = vmul.f32 %v313, %v320
    %v338 = vmul.f32 %v314, %v325
    %v339 = vmul.f32 %v315, %v330
    %v340 = vmul.f32 %v316, %v335
    %v341 = vadd.f32 %v337, %v338
    %v342 = vadd.f32 %v341, %v339
    %v343 = vadd.f32 %v342, %v340
    %v344 = vrot.slane %v343, 4
    %v345 = vadd.f32 %v343, %v344
    %v346 = vrot.slane %v345, 2
    %v347 = vadd.f32 %v345, %v346
    %v348 = vrot.slane %v347, 1
    %v349 = vadd.f32 %v347, %v348
    %vm350 = vcmp.gt.f32.partialorder %v349, 3.0
    %v351 = vmul.f32 %v349, 6.0
    %v352 = vsel %vm350, %v349, %v351
    %353 = vst [vmem:[%s3] sm:$0x1] %v352
    // Predicated region
    $region18: #{model_forward.1} parent=1 // pred_check
      _
    $region19: #{model_forward.1} parent=1 // pred_check_branch
      %355 = sbr.rel (0) target = $region21
    $region20: #{model_forward.1} parent=1 // pred_region
      _
    $region21: #{model_forward.1} parent=1 // pred_fallthru
      _
    // Predicated region
    $region22: #{model_forward.1} parent=1 // pred_check
      _
    $region23: #{model_forward.1} parent=1 // pred_check_branch
      %357 = sbr.rel (0) target = $region25
    $region24: #{model_forward.1} parent=1 // pred_region
      _
    $region25: #{model_forward.1} parent=1 // pred_fallthru
      _
    %358 = vsyncpa [#allocation3], 1

</llo_original>
